<compile_context>
chip_gen: v7x
topology: tpu7x:2x2x1
jax: 0.10.0
libtpu: 0.0.40
codegen_flags: <defaults>
</compile_context>

<pallas_src>
import functools

import jax
import jax.numpy as jnp
from jax import lax
from jax.experimental import pallas as pl
from jax.experimental.pallas import tpu as pltpu


_VMEM_LIMIT_BYTES = 32 * 1024 * 1024  # safe on v5e/v6e (128 MiB) and v7x (64 MiB)


def _choose_col_tile(C):
    # Lane-axis tile must be a multiple of 128 or the full extent.
    if C % 128 == 0:
        for tc in (512, 256, 128):
            if C % tc == 0:
                return tc
    return C  # full extent (required when C is not a multiple of 128)


def _choose_row_tile(N, TC, itemsize=4, target_rows=1024, per_buf_budget=4 << 20):
    if N <= target_rows:
        return N  # full extent — always a legal block shape
    budget_rows = max(8, (per_buf_budget // (TC * itemsize)) // 8 * 8)
    return min(target_rows, budget_rows)  # multiple of 8


def _bn_stats_kernel(x_ref, sum_ref, sq_ref, *, n_rows, tn):
    """Accumulate per-lane sum / sum-of-squares over the N (sublane) axis."""
    n_idx = pl.program_id(1)

    @pl.when(n_idx == 0)
    def _():
        sum_ref[...] = jnp.zeros_like(sum_ref)
        sq_ref[...] = jnp.zeros_like(sq_ref)

    x = x_ref[...].astype(jnp.float32)  # (TN, TC), f32 accumulation
    if n_rows % tn != 0:
        # Tail tile is padded by Pallas; zero the out-of-range rows.
        row = lax.broadcasted_iota(jnp.int32, x.shape, 0) + n_idx * tn
        x = jnp.where(row < n_rows, x, 0.0)
    sum_ref[...] += jnp.sum(x, axis=0, keepdims=True)
    sq_ref[...] += jnp.sum(x * x, axis=0, keepdims=True)


def _bn_apply_kernel(x_ref, scale_ref, shift_ref, o_ref):
    """y = x * scale + shift (normalization + affine folded per-feature)."""
    x = x_ref[...].astype(jnp.float32)
    o_ref[...] = (x * scale_ref[...] + shift_ref[...]).astype(o_ref.dtype)


def batchnorm1d_pallas(x2d, gamma, beta, eps=1e-5, block_rows=None):
    """x2d: (N, C). gamma/beta: (C,). Returns (N, C) training-mode BN output."""
    N, C = x2d.shape

    # --- lane-density fold for narrow feature dims (free contiguous reshape) -
    fold = 1
    if C < 128 and 128 % C == 0:
        f = 128 // C
        if N % f == 0:
            fold = f
    Nf, Cf = N // fold, C * fold
    xf = x2d.reshape(Nf, Cf)

    TC = _choose_col_tile(Cf)
    TN = block_rows if block_rows is not None else _choose_row_tile(Nf, TC)
    TN = min(TN, Nf)
    num_c = Cf // TC
    num_n = pl.cdiv(Nf, TN)

    # ---- pass 1: streamed per-lane sum / sum-of-squares ---------------------
    stats_kernel = functools.partial(_bn_stats_kernel, n_rows=Nf, tn=TN)
    sums_f, sqs_f = pl.pallas_call(
        stats_kernel,
        out_shape=(jax.ShapeDtypeStruct((1, Cf), jnp.float32),
                   jax.ShapeDtypeStruct((1, Cf), jnp.float32)),
        grid_spec=pltpu.PrefetchScalarGridSpec(
            num_scalar_prefetch=0,
            grid=(num_c, num_n),  # reduction axis (N tiles) last
            in_specs=[pl.BlockSpec((TN, TC), lambda c, n: (n, c))],
            out_specs=(pl.BlockSpec((1, TC), lambda c, n: (0, c)),
                       pl.BlockSpec((1, TC), lambda c, n: (0, c))),
        ),
        compiler_params=pltpu.CompilerParams(
            dimension_semantics=("parallel", "arbitrary"),
            vmem_limit_bytes=_VMEM_LIMIT_BYTES,
        ),
    )(xf)

    # ---- tiny epilogue: un-fold lane groups, fold stats+affine into scale/shift
    sums = sums_f.reshape(fold, C).sum(axis=0, keepdims=True)  # (1, C)
    sqs = sqs_f.reshape(fold, C).sum(axis=0, keepdims=True)    # (1, C)
    inv_n = 1.0 / N
    mean = sums * inv_n
    var = jnp.maximum(sqs * inv_n - mean * mean, 0.0)  # biased variance
    inv_std = lax.rsqrt(var + eps)
    scale = gamma.reshape(1, C).astype(jnp.float32) * inv_std
    shift = beta.reshape(1, C).astype(jnp.float32) - mean * scale
    if fold > 1:
        # lane j of the folded layout holds feature j % C
        scale = jnp.tile(scale, (1, fold))  # (1, Cf)
        shift = jnp.tile(shift, (1, fold))  # (1, Cf)

    # ---- pass 2: streamed apply, fully parallel ------------------------------
    out = pl.pallas_call(
        _bn_apply_kernel,
        out_shape=jax.ShapeDtypeStruct((Nf, Cf), x2d.dtype),
        grid_spec=pltpu.PrefetchScalarGridSpec(
            num_scalar_prefetch=0,
            grid=(num_c, num_n),
            in_specs=[pl.BlockSpec((TN, TC), lambda c, n: (n, c)),
                      pl.BlockSpec((1, TC), lambda c, n: (0, c)),
                      pl.BlockSpec((1, TC), lambda c, n: (0, c))],
            out_specs=pl.BlockSpec((TN, TC), lambda c, n: (n, c)),
        ),
        compiler_params=pltpu.CompilerParams(
            dimension_semantics=("parallel", "parallel"),
            vmem_limit_bytes=_VMEM_LIMIT_BYTES,
        ),
    )(xf, scale, shift)
    return out.reshape(N, C)


class BatchNormPallas:
    """Mirrors lib/models/utils/helpers.py::BatchNorm forward (training mode)."""

    def __init__(self, num_features, eps=1e-5, affine=True):
        self.num_features = num_features
        self.eps = eps
        self.affine = affine
        # torch default init: weight = ones, bias = zeros (identity if not affine)
        self.weight = jnp.ones((num_features,), jnp.float32)
        self.bias = jnp.zeros((num_features,), jnp.float32)

    def __call__(self, x, block_rows=None):
        if x.ndim == 3:
            bsz, seq_len, feature_size = x.shape
            x2d = x.reshape(-1, feature_size)
            out = batchnorm1d_pallas(x2d, self.weight, self.bias, self.eps,
                                     block_rows=block_rows)
            return out.reshape(bsz, seq_len, -1)
        else:
            return batchnorm1d_pallas(x, self.weight, self.bias, self.eps,
                                      block_rows=block_rows)


def _reference(x, weight, bias, eps):
    # Pure-JAX reference of training-mode BatchNorm1d (biased variance).
    orig_shape = x.shape
    feat = orig_shape[-1]
    x2d = x.reshape(-1, feat)
    mean = jnp.mean(x2d, axis=0, keepdims=True)
    var = jnp.mean((x2d - mean) ** 2, axis=0, keepdims=True)
    y = (x2d - mean) / jnp.sqrt(var + eps) * weight + bias
    return y.reshape(orig_shape)


if __name__ == "__main__":
    key = jax.random.PRNGKey(0)

    # Small shape implied by the module's 3D path: (bsz, seq_len, hidden).
    bsz, seq_len, hidden = 2, 8, 32
    x = jax.random.normal(key, (bsz, seq_len, hidden), dtype=jnp.float32)

    bn = BatchNormPallas(num_features=hidden, eps=1e-5, affine=True)
    out = jax.block_until_ready(bn(x))
    ref = _reference(x, bn.weight, bn.bias, bn.eps)
    assert out.shape == (bsz, seq_len, hidden)
    assert jnp.allclose(out, ref, atol=1e-4, rtol=1e-4)

    # Second check exercising the tiled path (grid over N with a partial tail
    # tile). With C=32 the lane fold is 4, so N = 4*520 = 2080 rows become
    # 520 folded rows of width 128; forced 512-row tiles -> 2 N-tiles with an
    # 8-row tail (tail-masking path active).
    key2 = jax.random.PRNGKey(1)
    x_big = jax.random.normal(key2, (4, 520, hidden), dtype=jnp.float32) * 2.0 + 0.5
    out_big = jax.block_until_ready(bn(x_big, block_rows=512))
    ref_big = _reference(x_big, bn.weight, bn.bias, bn.eps)
    assert out_big.shape == x_big.shape
    assert jnp.allclose(out_big, ref_big, atol=1e-4, rtol=1e-4)

    # Third check: a feature dim that is a multiple of 128 (no fold, multi
    # C-tile path) with a non-trivial N grid.
    key3 = jax.random.PRNGKey(2)
    bn256 = BatchNormPallas(num_features=256, eps=1e-5, affine=True)
    x_wide = jax.random.normal(key3, (2080, 256), dtype=jnp.float32) * 1.7 - 0.3
    out_wide = jax.block_until_ready(bn256(x_wide, block_rows=512))
    ref_wide = _reference(x_wide, bn256.weight, bn256.bias, bn256.eps)
    assert out_wide.shape == x_wide.shape
    assert jnp.allclose(out_wide, ref_wide, atol=1e-4, rtol=1e-4)

    print("KERNEL_OK")
</pallas_src>

<mosaic_0001>
module attributes {stable_mosaic.version = 11 : i64} {
  func.func @_bn_stats_kernel(%arg0: i32, %arg1: i32, %arg2: memref<4x128xf32, #tpu.memory_space<vmem>>, %arg3: memref<1x128xf32, #tpu.memory_space<vmem>>, %arg4: memref<1x128xf32, #tpu.memory_space<vmem>>) attributes {dimension_semantics = [#tpu.dimension_semantics<parallel>, #tpu.dimension_semantics<arbitrary>], iteration_bounds = array<i64: 1, 1>, scalar_prefetch = 0 : i64, scratch_operands = 0 : i64, tpu.core_type = #tpu.core_type<tc>, window_params = [{transform_indices = @transform_0, window_bounds = array<i64: 4, 128>}, {transform_indices = @transform_1, window_bounds = array<i64: 1, 128>}, {transform_indices = @transform_2, window_bounds = array<i64: 1, 128>}]} {
    %c0_i32 = arith.constant 0 : i32
    %0 = arith.cmpi eq, %arg1, %c0_i32 : i32
    %1 = arith.extui %0 : i1 to i32
    %c0_i32_0 = arith.constant 0 : i32
    %2 = arith.cmpi ne, %1, %c0_i32_0 : i32
    scf.if %2 {
      %cst_11 = arith.constant 0.000000e+00 : f32
      %15 = vector.broadcast %cst_11 : f32 to vector<1x128xf32>
      %c0_12 = arith.constant 0 : index
      %c0_13 = arith.constant 0 : index
      %16 = vector.load %arg3[%c0_12, %c0_13] : memref<1x128xf32, #tpu.memory_space<vmem>>, vector<1x128xf32>
      tpu.vector_store %arg3[%c0_12, %c0_13], %15 {strides = array<i32>} : memref<1x128xf32, #tpu.memory_space<vmem>>, vector<1x128xf32>,
      %cst_14 = arith.constant 0.000000e+00 : f32
      %17 = vector.broadcast %cst_14 : f32 to vector<1x128xf32>
      %c0_15 = arith.constant 0 : index
      %c0_16 = arith.constant 0 : index
      %18 = vector.load %arg4[%c0_15, %c0_16] : memref<1x128xf32, #tpu.memory_space<vmem>>, vector<1x128xf32>
      tpu.vector_store %arg4[%c0_15, %c0_16], %17 {strides = array<i32>} : memref<1x128xf32, #tpu.memory_space<vmem>>, vector<1x128xf32>,
    } else {
    }
    %c0 = arith.constant 0 : index
    %c0_1 = arith.constant 0 : index
    %3 = vector.load %arg2[%c0, %c0_1] : memref<4x128xf32, #tpu.memory_space<vmem>>, vector<4x128xf32>
    %c0_2 = arith.constant 0 : index
    %c0_3 = arith.constant 0 : index
    %4 = vector.load %arg3[%c0_2, %c0_3] : memref<1x128xf32, #tpu.memory_space<vmem>>, vector<1x128xf32>
    %cst = arith.constant dense<0.000000e+00> : vector<128xf32>
    %5 = vector.multi_reduction <add>, %3, %cst [0] : vector<4x128xf32> to vector<128xf32>
    %6 = vector.shape_cast %5 : vector<128xf32> to vector<1x128xf32>
    %7 = arith.addf %4, %6 : vector<1x128xf32>
    %c0_4 = arith.constant 0 : index
    %c0_5 = arith.constant 0 : index
    %8 = vector.load %arg3[%c0_4, %c0_5] : memref<1x128xf32, #tpu.memory_space<vmem>>, vector<1x128xf32>
    tpu.vector_store %arg3[%c0_4, %c0_5], %7 {strides = array<i32>} : memref<1x128xf32, #tpu.memory_space<vmem>>, vector<1x128xf32>,
    %c0_6 = arith.constant 0 : index
    %c0_7 = arith.constant 0 : index
    %9 = vector.load %arg4[%c0_6, %c0_7] : memref<1x128xf32, #tpu.memory_space<vmem>>, vector<1x128xf32>
    %10 = arith.mulf %3, %3 : vector<4x128xf32>
    %cst_8 = arith.constant dense<0.000000e+00> : vector<128xf32>
    %11 = vector.multi_reduction <add>, %10, %cst_8 [0] : vector<4x128xf32> to vector<128xf32>
    %12 = vector.shape_cast %11 : vector<128xf32> to vector<1x128xf32>
    %13 = arith.addf %9, %12 : vector<1x128xf32>
    %c0_9 = arith.constant 0 : index
    %c0_10 = arith.constant 0 : index
    %14 = vector.load %arg4[%c0_9, %c0_10] : memref<1x128xf32, #tpu.memory_space<vmem>>, vector<1x128xf32>
    tpu.vector_store %arg4[%c0_9, %c0_10], %13 {strides = array<i32>} : memref<1x128xf32, #tpu.memory_space<vmem>>, vector<1x128xf32>,
    return
  }
  func.func @transform_0(%arg0: i32, %arg1: i32) -> (i32, i32) {
    %c0_i32 = arith.constant 0 : i32
    return %arg1, %arg0 : i32, i32
  }
  func.func @transform_1(%arg0: i32, %arg1: i32) -> (i32, i32) {
    %c0_i32 = arith.constant 0 : i32
    %c0_i32_0 = arith.constant 0 : i32
    return %c0_i32, %arg0 : i32, i32
  }
  func.func @transform_2(%arg0: i32, %arg1: i32) -> (i32, i32) {
    %c0_i32 = arith.constant 0 : i32
    %c0_i32_0 = arith.constant 0 : i32
    return %c0_i32, %arg0 : i32, i32
  }
}

</mosaic_0001>

<llo_original>
// kernel: tpu_custom_call.1
$region0: #{tpu_custom_call.1}
  #allocation0 [shape = 'u32[]', space=smem, size = 0x4, offset = 0x4, fixed_abs, tag = 'smem constant byte address 0x4 - core index']
  #allocation1 [shape = 'u32[144,128]{1,0:T(1,128)}', space=vmem, size = 0x12000, scoped, tag = 'internal scratch']
  %s0 = inlined_call_operand.hbm [shape: f32[4,128], index: 0, kind: input, shape index: {}]
  %s1 = inlined_call_operand.hbm [shape: f32[1,128], index: 1, kind: output, shape index: {0}]
  %s2 = inlined_call_operand.hbm [shape: f32[1,128], index: 2, kind: output, shape index: {1}]
  %3 = xla_tuple %s1, %s2
  %s4 = sld [smem:[#allocation0]]
  $region30: #{tpu_custom_call.1} parent=0
    _
  %s6 = ssub.s32 1, %s4
  %s7 = scalar_select 0, %s6, %s4
  $region1: #{tpu_custom_call.1} parent=0
    #allocation2 [shape = 'u8[2048]{0}', space=vmem, size = 0x800, scoped, tag = 'input window, operand 0, single buffered']
    #allocation3 [shape = 's32[1]{0}', space=sflag, size = 0x4, scoped, tag = 'scoped memory for tpu_custom_call.1']
    #allocation4 [shape = 's32[1]{0}', space=sflag, size = 0x4, scoped, tag = 'scoped memory for tpu_custom_call.1']
    #allocation5 [shape = 'u8[512]{0}', space=vmem, size = 0x400, scoped, tag = 'output window, operand 0, single buffered']
    #allocation6 [shape = 'u8[512]{0}', space=vmem, size = 0x400, scoped, tag = 'output window, operand 1, single buffered']
    #allocation7 [shape = 's32[1]{0}', space=sflag, size = 0x4, scoped, tag = 'scoped memory for tpu_custom_call.1']
    %8 = vsyncpa [#allocation3], 0
    %9 = vsyncpa [#allocation4], 0
    %10 = vsyncpa [#allocation7], 0
    // Predicated region
    $region2: #{tpu_custom_call.1} parent=1 // pred_check
      _
    $region3: #{tpu_custom_call.1} parent=1 // pred_check_branch
      %12 = sbr.rel (0) target = $region5
    $region4: #{tpu_custom_call.1} parent=1 // pred_region
      %s14 = ssub.s32 64, 64
      %15 = vsyncadd [#allocation3], %s14
      %s17 = sshll.u32 [#allocation2], 4
      %s18 = int_to_ptr.vmem [resolvable:$true] %s17
      %20 = dma.hbm_to_vmem [thread:$0]  %s0, 64, %s18, [#allocation3]
    $region5: #{tpu_custom_call.1} parent=1 // pred_fallthru
      _
    // Predicated region
    $region6: #{tpu_custom_call.1} parent=1 // pred_check
      _
    $region7: #{tpu_custom_call.1} parent=1 // pred_check_branch
      %22 = sbr.rel (0) target = $region9
    $region8: #{tpu_custom_call.1} parent=1 // pred_region
      %23 = dma.done [#allocation3], 64
    $region9: #{tpu_custom_call.1} parent=1 // pred_fallthru
      _
    %p24 = scmp.eq.s32.totalorder 0, 0
    // Predicated region
    $region10: #{tpu_custom_call.1} parent=1 // pred_check
      %p25 = pneg %p24
    $region11: #{tpu_custom_call.1} parent=1 // pred_check_branch
      %27 = sbr.rel (%p25) target = $region13
    $region12: #{tpu_custom_call.1} parent=1 // pred_region
      %28 = vst [vmem:[#allocation5] sm:$0x1] 0.0
      %29 = vst [vmem:[#allocation6] sm:$0x1] 0.0
    $region13: #{tpu_custom_call.1} parent=1 // pred_fallthru
      _
    %v30 = vld [vmem:[#allocation2] sm:$0xf]
    %v31 = vld [vmem:[#allocation5] sm:$0x1]
    %vm32 = vcmask 1043456
    %v33 = vsel %vm32, %v30, 0.0
    %v34 = vrot.slane %v33, 4
    %v35 = vadd.f32 %v33, %v34
    %v36 = vrot.slane %v35, 2
    %v37 = vadd.f32 %v35, %v36
    %v38 = vrot.slane %v37, 1
    %v39 = vadd.f32 %v37, %v38
    %v40 = vadd.f32 %v31, %v39
    %41 = vst [vmem:[#allocation5] sm:$0x1] %v40
    %v42 = vld [vmem:[#allocation6] sm:$0x1]
    %v43 = vmul.f32 %v30, %v30
    %v44 = vsel %vm32, %v43, 0.0
    %v45 = vrot.slane %v44, 4
    %v46 = vadd.f32 %v44, %v45
    %v47 = vrot.slane %v46, 2
    %v48 = vadd.f32 %v46, %v47
    %v49 = vrot.slane %v48, 1
    %v50 = vadd.f32 %v48, %v49
    %v51 = vadd.f32 %v42, %v50
    %52 = vst [vmem:[#allocation6] sm:$0x1] %v51
    // Predicated region
    $region14: #{tpu_custom_call.1} parent=1 // pred_check
      _
    $region15: #{tpu_custom_call.1} parent=1 // pred_check_branch
      %54 = sbr.rel (0) target = $region17
    $region16: #{tpu_custom_call.1} parent=1 // pred_region
      %s56 = ssub.s32 16, 16
      %57 = vsyncadd [#allocation4], %s56
      %s59 = sshll.u32 [#allocation5], 4
      %s60 = int_to_ptr.vmem [resolvable:$true] %s59
      %62 = dma.vmem_to_hbm [thread:$0]  %s60, 16, %s1, [#allocation4]
    $region17: #{tpu_custom_call.1} parent=1 // pred_fallthru
      _
    // Predicated region
    $region18: #{tpu_custom_call.1} parent=1 // pred_check
      _
    $region19: #{tpu_custom_call.1} parent=1 // pred_check_branch
      %64 = sbr.rel (0) target = $region21
    $region20: #{tpu_custom_call.1} parent=1 // pred_region
      %s66 = ssub.s32 16, 16
      %67 = vsyncadd [#allocation7], %s66
      %s69 = sshll.u32 [#allocation6], 4
      %s70 = int_to_ptr.vmem [resolvable:$true] %s69
      %72 = dma.vmem_to_hbm [thread:$0]  %s70, 16, %s2, [#allocation7]
    $region21: #{tpu_custom_call.1} parent=1 // pred_fallthru
      _
    // Predicated region
    $region22: #{tpu_custom_call.1} parent=1 // pred_check
      _
    $region23: #{tpu_custom_call.1} parent=1 // pred_check_branch
      %74 = sbr.rel (0) target = $region25
    $region24: #{tpu_custom_call.1} parent=1 // pred_region
      %75 = dma.done [#allocation4], 16
    $region25: #{tpu_custom_call.1} parent=1 // pred_fallthru
      _
    // Predicated region
    $region26: #{tpu_custom_call.1} parent=1 // pred_check
      _
    $region27: #{tpu_custom_call.1} parent=1 // pred_check_branch
      %77 = sbr.rel (0) target = $region29
    $region28: #{tpu_custom_call.1} parent=1 // pred_region
      %78 = dma.done [#allocation7], 16
    $region29: #{tpu_custom_call.1} parent=1 // pred_fallthru
      _
    %79 = vsyncpa [#allocation3], 1
    %80 = vsyncpa [#allocation4], 1
    %81 = vsyncpa [#allocation7], 1

</llo_original>
